<compile_context>
chip_gen: v7x
topology: tpu7x:2x2x1
jax: 0.10.0
libtpu: 0.0.40
codegen_flags: <defaults>
</compile_context>

<pallas_src>
import math

import jax
import jax.numpy as jnp
from jax.experimental import pallas as pl
from jax.experimental.pallas import tpu as pltpu


def criticq_kernel(x_ref, w1_ref, b1_ref, w2_ref, b2_ref, w3_ref, b3_ref,
                   q_ref):
    # fc1 + relu   (x and w1 already bf16; f32 accumulate; f32 epilogue)
    h1 = (jnp.dot(x_ref[...], w1_ref[...], preferred_element_type=jnp.float32)
          + b1_ref[...])
    h1 = jnp.maximum(h1, 0.0)

    # fc2 (with eval-mode BN affine already folded into w2/b2) + relu
    h2 = (jnp.dot(h1.astype(jnp.bfloat16), w2_ref[...],
                  preferred_element_type=jnp.float32) + b2_ref[...])
    h2 = jnp.maximum(h2, 0.0)

    # fc3 -> one Q value per row
    q_ref[...] = (jnp.dot(h2.astype(jnp.bfloat16), w3_ref[...],
                          preferred_element_type=jnp.float32) + b3_ref[...])


def criticq_forward(state, action, params, *, batch_tile=2048):
    """state: [B, S] f32, action: [B, A] f32 -> Q: [B, 1] f32 (eval-mode BN)."""
    B, S = state.shape
    A = action.shape[1]
    SA = S + A
    F1 = params["w1"].shape[1]
    F2 = params["w2"].shape[1]

    # --- fold eval-mode BatchNorm into fc2 (exact in f32) --------------------
    inv = jax.lax.rsqrt(params["bn_var"] + params["bn_eps"])
    bn_scale = params["bn_gamma"] * inv                              # (1, F1)
    bn_shift = params["bn_beta"] - params["bn_mean"] * bn_scale      # (1, F1)
    w2_folded = bn_scale.reshape(F1, 1) * params["w2"]               # (F1, F2)
    b2_folded = bn_shift @ params["w2"] + params["b2"]               # (1, F2)

    # --- bf16 operands for the MXU (cast once in the wrapper) ----------------
    x = jnp.concatenate([state, action], axis=-1).astype(jnp.bfloat16)  # (B, SA)
    w1 = params["w1"].astype(jnp.bfloat16)
    w2 = w2_folded.astype(jnp.bfloat16)
    w3 = params["w3"].astype(jnp.bfloat16)
    b1 = params["b1"].astype(jnp.float32)
    b2 = b2_folded.astype(jnp.float32)
    b3 = params["b3"].astype(jnp.float32)

    # --- batch tile selection -------------------------------------------------
    # Per-tile VMEM @ btile=2048: x(bf16) ~80 KB x2 buffers, h1/h2 f32 ~1 MB
    # each + bf16 copies ~0.5 MB each, weights ~40 KB -> well under the 32 MiB
    # scoped default on every generation (incl. v7x's 64 MiB physical VMEM).
    btile = min(batch_tile, B)
    steps = pl.cdiv(B, btile)
    if steps > 1 and steps % 2 == 1:
        # Prefer an even number of grid steps so v7x's two TensorCores stay
        # balanced; no effect on v5e/v6e beyond a slightly smaller tile.
        steps += 1
        btile = ((B + steps - 1) // steps + 7) // 8 * 8
    grid = (pl.cdiv(B, btile),)

    def rows(i):    # batch-tiled operands
        return (i, 0)

    def const(i):   # weights / biases: VMEM-resident across batch tiles
        return (0, 0)

    q = pl.pallas_call(
        criticq_kernel,
        out_shape=jax.ShapeDtypeStruct((B, 1), jnp.float32),
        grid_spec=pltpu.PrefetchScalarGridSpec(
            num_scalar_prefetch=0,
            grid=grid,
            in_specs=[
                pl.BlockSpec((btile, SA), rows),    # x = cat(state, action) bf16
                pl.BlockSpec((SA, F1), const),      # w1   (bf16)
                pl.BlockSpec((1, F1), const),       # b1   (f32)
                pl.BlockSpec((F1, F2), const),      # w2'  (bf16, BN folded)
                pl.BlockSpec((1, F2), const),       # b2'  (f32, BN folded)
                pl.BlockSpec((F2, 1), const),       # w3   (bf16)
                pl.BlockSpec((1, 1), const),        # b3   (f32)
            ],
            out_specs=pl.BlockSpec((btile, 1), rows),
        ),
        compiler_params=pltpu.CompilerParams(
            dimension_semantics=("parallel",),      # v7x: shard batch over 2 TCs
        ),
    )(x, w1, b1, w2, b2, w3, b3)
    return q


def init_criticq_params(key, input_dim, fc1_units=128, fc2_units=128):
    """Init mirroring CriticQ.reset_parameters().

    hidden_init uses fan_in = weight.size(0) = out_features (as written in
    the reference); biases keep the default nn.Linear init range. fc3 is
    Linear(fc1_units, 1) applied to fc2's output (requires fc1 == fc2 units,
    as in the PyTorch defaults). BN stats are fresh running stats.
    """
    ks = jax.random.split(key, 6)

    def u(k, shape, lim):
        return jax.random.uniform(k, shape, jnp.float32, minval=-lim, maxval=lim)

    lim1 = 1.0 / math.sqrt(fc1_units)      # hidden_init(fc1)
    lim2 = 1.0 / math.sqrt(fc2_units)      # hidden_init(fc2)
    b1_lim = 1.0 / math.sqrt(input_dim)    # default nn.Linear bias init
    b2_lim = 1.0 / math.sqrt(fc1_units)
    b3_lim = 1.0 / math.sqrt(fc1_units)

    return {
        # weights stored [in, out] (transposed vs nn.Linear)
        "w1": u(ks[0], (input_dim, fc1_units), lim1),
        "b1": u(ks[1], (1, fc1_units), b1_lim),
        "w2": u(ks[2], (fc1_units, fc2_units), lim2),
        "b2": u(ks[3], (1, fc2_units), b2_lim),
        "w3": u(ks[4], (fc2_units, 1), 0.003),
        "b3": u(ks[5], (1, 1), b3_lim),
        "bn_gamma": jnp.ones((1, fc1_units), jnp.float32),
        "bn_beta": jnp.zeros((1, fc1_units), jnp.float32),
        "bn_mean": jnp.zeros((1, fc1_units), jnp.float32),
        "bn_var": jnp.ones((1, fc1_units), jnp.float32),
        "bn_eps": 1e-5,
    }


def criticq_forward_ref(state, action, params):
    """Pure-JAX reference mirroring the kernel's BN fold + bf16 matmul precision."""
    inv = jax.lax.rsqrt(params["bn_var"] + params["bn_eps"])
    bn_scale = params["bn_gamma"] * inv
    bn_shift = params["bn_beta"] - params["bn_mean"] * bn_scale
    w2f = bn_scale.reshape(-1, 1) * params["w2"]
    b2f = bn_shift @ params["w2"] + params["b2"]

    x = jnp.concatenate([state, action], axis=-1).astype(jnp.bfloat16)
    h1 = jnp.maximum(
        jnp.dot(x, params["w1"].astype(jnp.bfloat16),
                preferred_element_type=jnp.float32) + params["b1"], 0.0)
    h2 = jnp.maximum(
        jnp.dot(h1.astype(jnp.bfloat16), w2f.astype(jnp.bfloat16),
                preferred_element_type=jnp.float32) + b2f, 0.0)
    return (jnp.dot(h2.astype(jnp.bfloat16), params["w3"].astype(jnp.bfloat16),
                    preferred_element_type=jnp.float32) + params["b3"])


def criticq_forward_f32_ref(state, action, params):
    """Full-f32, unfolded reference matching the original PyTorch eval forward."""
    x = jnp.concatenate([state, action], axis=-1)
    h1 = jnp.maximum(x @ params["w1"] + params["b1"], 0.0)
    inv = jax.lax.rsqrt(params["bn_var"] + params["bn_eps"])
    h1 = (h1 - params["bn_mean"]) * inv * params["bn_gamma"] + params["bn_beta"]
    h2 = jnp.maximum(h1 @ params["w2"] + params["b2"], 0.0)
    return h2 @ params["w3"] + params["b3"]


if __name__ == "__main__":
    # Small shapes consistent with the module's forward.
    batch = 8
    state_size = 16
    action_size = 4
    fc1_units = 128
    fc2_units = 128

    root = jax.random.PRNGKey(0)
    k_params, k_state, k_action = jax.random.split(root, 3)

    params = init_criticq_params(k_params, state_size + action_size,
                                 fc1_units, fc2_units)
    state = jax.random.normal(k_state, (batch, state_size), jnp.float32)
    action = jax.random.normal(k_action, (batch, action_size), jnp.float32)

    q = criticq_forward(state, action, params)
    jax.block_until_ready(q)
    assert q.shape == (batch, 1)

    # Tight check against a pure-JAX reference at matching (bf16) precision.
    q_ref = criticq_forward_ref(state, action, params)
    assert jnp.allclose(q, q_ref, atol=1e-4, rtol=1e-3)

    # Loose check against the full-f32 original-module semantics.
    q_f32 = criticq_forward_f32_ref(state, action, params)
    assert jnp.allclose(q, q_f32, atol=3e-2, rtol=3e-2)

    print("KERNEL_OK")
</pallas_src>

<mosaic_0001>
module attributes {stable_mosaic.version = 11 : i64} {
  func.func @criticq_kernel(%arg0: i32, %arg1: memref<8x20xbf16, #tpu.memory_space<vmem>>, %arg2: memref<20x128xbf16, #tpu.memory_space<vmem>>, %arg3: memref<1x128xf32, #tpu.memory_space<vmem>>, %arg4: memref<128x128xbf16, #tpu.memory_space<vmem>>, %arg5: memref<1x128xf32, #tpu.memory_space<vmem>>, %arg6: memref<128x1xbf16, #tpu.memory_space<vmem>>, %arg7: memref<1x1xf32, #tpu.memory_space<vmem>>, %arg8: memref<8x1xf32, #tpu.memory_space<vmem>>) attributes {dimension_semantics = [#tpu.dimension_semantics<parallel>], iteration_bounds = array<i64: 1>, scalar_prefetch = 0 : i64, scratch_operands = 0 : i64, tpu.core_type = #tpu.core_type<tc>, window_params = [{transform_indices = @transform_0, window_bounds = array<i64: 8, 20>}, {pipeline_mode = #tpu.pipeline_mode<synchronous>, transform_indices = @transform_1, window_bounds = array<i64: 20, 128>}, {pipeline_mode = #tpu.pipeline_mode<synchronous>, transform_indices = @transform_2, window_bounds = array<i64: 1, 128>}, {pipeline_mode = #tpu.pipeline_mode<synchronous>, transform_indices = @transform_3, window_bounds = array<i64: 128, 128>}, {pipeline_mode = #tpu.pipeline_mode<synchronous>, transform_indices = @transform_4, window_bounds = array<i64: 1, 128>}, {pipeline_mode = #tpu.pipeline_mode<synchronous>, transform_indices = @transform_5, window_bounds = array<i64: 128, 1>}, {pipeline_mode = #tpu.pipeline_mode<synchronous>, transform_indices = @transform_6, window_bounds = array<i64: 1, 1>}, {transform_indices = @transform_7, window_bounds = array<i64: 8, 1>}]} {
    %c0 = arith.constant 0 : index
    %c0_0 = arith.constant 0 : index
    %0 = vector.load %arg1[%c0, %c0_0] : memref<8x20xbf16, #tpu.memory_space<vmem>>, vector<8x20xbf16>
    %c0_1 = arith.constant 0 : index
    %c0_2 = arith.constant 0 : index
    %1 = vector.load %arg2[%c0_1, %c0_2] : memref<20x128xbf16, #tpu.memory_space<vmem>>, vector<20x128xbf16>
    %cst = arith.constant dense<0.000000e+00> : vector<8x128xf32>
    %2 = tpu.matmul %0, %1, %cst {dimension_numbers = #tpu.dot_dimension_numbers<[1], [0], [0], [1], [0, 0, 1, 1], [], []>} : vector<8x20xbf16>, vector<20x128xbf16>, vector<8x128xf32> -> vector<8x128xf32>
    %c0_3 = arith.constant 0 : index
    %c0_4 = arith.constant 0 : index
    %3 = vector.load %arg3[%c0_3, %c0_4] : memref<1x128xf32, #tpu.memory_space<vmem>>, vector<1x128xf32>
    %4 = vector.broadcast %3 : vector<1x128xf32> to vector<8x128xf32>
    %5 = arith.addf %2, %4 : vector<8x128xf32>
    %cst_5 = arith.constant 0.000000e+00 : f32
    %6 = vector.broadcast %cst_5 : f32 to vector<8x128xf32>
    %7 = arith.maximumf %5, %6 : vector<8x128xf32>
    %8 = arith.truncf %7 : vector<8x128xf32> to vector<8x128xbf16>
    %c0_6 = arith.constant 0 : index
    %c0_7 = arith.constant 0 : index
    %9 = vector.load %arg4[%c0_6, %c0_7] : memref<128x128xbf16, #tpu.memory_space<vmem>>, vector<128x128xbf16>
    %cst_8 = arith.constant dense<0.000000e+00> : vector<8x128xf32>
    %10 = tpu.matmul %8, %9, %cst_8 {dimension_numbers = #tpu.dot_dimension_numbers<[1], [0], [0], [1], [0, 0, 1, 1], [], []>} : vector<8x128xbf16>, vector<128x128xbf16>, vector<8x128xf32> -> vector<8x128xf32>
    %c0_9 = arith.constant 0 : index
    %c0_10 = arith.constant 0 : index
    %11 = vector.load %arg5[%c0_9, %c0_10] : memref<1x128xf32, #tpu.memory_space<vmem>>, vector<1x128xf32>
    %12 = vector.broadcast %11 : vector<1x128xf32> to vector<8x128xf32>
    %13 = arith.addf %10, %12 : vector<8x128xf32>
    %cst_11 = arith.constant 0.000000e+00 : f32
    %14 = vector.broadcast %cst_11 : f32 to vector<8x128xf32>
    %15 = arith.maximumf %13, %14 : vector<8x128xf32>
    %16 = arith.truncf %15 : vector<8x128xf32> to vector<8x128xbf16>
    %c0_12 = arith.constant 0 : index
    %c0_13 = arith.constant 0 : index
    %17 = vector.load %arg6[%c0_12, %c0_13] : memref<128x1xbf16, #tpu.memory_space<vmem>>, vector<128x1xbf16>
    %cst_14 = arith.constant dense<0.000000e+00> : vector<8x1xf32>
    %18 = tpu.matmul %16, %17, %cst_14 {dimension_numbers = #tpu.dot_dimension_numbers<[1], [0], [0], [1], [0, 0, 1, 1], [], []>} : vector<8x128xbf16>, vector<128x1xbf16>, vector<8x1xf32> -> vector<8x1xf32>
    %c0_15 = arith.constant 0 : index
    %c0_16 = arith.constant 0 : index
    %19 = vector.load %arg7[%c0_15, %c0_16] : memref<1x1xf32, #tpu.memory_space<vmem>>, vector<1x1xf32>
    %20 = vector.broadcast %19 : vector<1x1xf32> to vector<8x1xf32>
    %21 = arith.addf %18, %20 : vector<8x1xf32>
    %c0_17 = arith.constant 0 : index
    %c0_18 = arith.constant 0 : index
    %22 = vector.load %arg8[%c0_17, %c0_18] : memref<8x1xf32, #tpu.memory_space<vmem>>, vector<8x1xf32>
    tpu.vector_store %arg8[%c0_17, %c0_18], %21 {strides = array<i32>} : memref<8x1xf32, #tpu.memory_space<vmem>>, vector<8x1xf32>,
    return
  }
  func.func @transform_0(%arg0: i32) -> (i32, i32) {
    %c0_i32 = arith.constant 0 : i32
    %c0_i32_0 = arith.constant 0 : i32
    return %arg0, %c0_i32 : i32, i32
  }
  func.func @transform_1(%arg0: i32) -> (i32, i32) {
    %c0_i32 = arith.constant 0 : i32
    %c0_i32_0 = arith.constant 0 : i32
    %c0_i32_1 = arith.constant 0 : i32
    return %c0_i32, %c0_i32_0 : i32, i32
  }
  func.func @transform_2(%arg0: i32) -> (i32, i32) {
    %c0_i32 = arith.constant 0 : i32
    %c0_i32_0 = arith.constant 0 : i32
    %c0_i32_1 = arith.constant 0 : i32
    return %c0_i32, %c0_i32_0 : i32, i32
  }
  func.func @transform_3(%arg0: i32) -> (i32, i32) {
    %c0_i32 = arith.constant 0 : i32
    %c0_i32_0 = arith.constant 0 : i32
    %c0_i32_1 = arith.constant 0 : i32
    return %c0_i32, %c0_i32_0 : i32, i32
  }
  func.func @transform_4(%arg0: i32) -> (i32, i32) {
    %c0_i32 = arith.constant 0 : i32
    %c0_i32_0 = arith.constant 0 : i32
    %c0_i32_1 = arith.constant 0 : i32
    return %c0_i32, %c0_i32_0 : i32, i32
  }
  func.func @transform_5(%arg0: i32) -> (i32, i32) {
    %c0_i32 = arith.constant 0 : i32
    %c0_i32_0 = arith.constant 0 : i32
    %c0_i32_1 = arith.constant 0 : i32
    return %c0_i32, %c0_i32_0 : i32, i32
  }
  func.func @transform_6(%arg0: i32) -> (i32, i32) {
    %c0_i32 = arith.constant 0 : i32
    %c0_i32_0 = arith.constant 0 : i32
    %c0_i32_1 = arith.constant 0 : i32
    return %c0_i32, %c0_i32_0 : i32, i32
  }
  func.func @transform_7(%arg0: i32) -> (i32, i32) {
    %c0_i32 = arith.constant 0 : i32
    %c0_i32_0 = arith.constant 0 : i32
    return %arg0, %c0_i32 : i32, i32
  }
}

</mosaic_0001>

<llo_original>
// kernel: tpu_custom_call.1
$region0: #{tpu_custom_call.1}
  #allocation0 [shape = 'u32[]', space=smem, size = 0x4, offset = 0x4, fixed_abs, tag = 'smem constant byte address 0x4 - core index']
  #allocation1 [shape = 'u32[144,128]{1,0:T(1,128)}', space=vmem, size = 0x12000, scoped, tag = 'internal scratch']
  #allocation2 [shape = 'f32[1,1]{1,0:T(1,128)S(1)}', space=vmem, size = 0x200, scoped, tag = 'scoped memory for tpu_custom_call.1']
  %s0 = inlined_call_operand.vmem [shape: bf16[8,20], index: 0, kind: input, shape index: {}]
  %s1 = inlined_call_operand.vmem [shape: bf16[20,128], index: 1, kind: input, shape index: {}]
  %s2 = inlined_call_operand.hbm [shape: f32[1,128], index: 2, kind: input, shape index: {}]
  %s3 = inlined_call_operand.vmem [shape: bf16[128,128], index: 3, kind: input, shape index: {}]
  %s4 = inlined_call_operand.vmem [shape: f32[1,128], index: 4, kind: input, shape index: {}]
  %s5 = inlined_call_operand.vmem [shape: bf16[128,1], index: 5, kind: input, shape index: {}]
  %s6 = inlined_call_operand.<no memory space> [shape: f32[1,1], index: 6, kind: input, shape index: {}]
  %s7 = inlined_call_operand.vmem [shape: f32[8,1], index: 7, kind: output, shape index: {}]
  %s8 = sld [smem:[#allocation0]]
  $region42: #{tpu_custom_call.1} parent=0
    _
  %s10 = ssub.s32 1, %s8
  %s11 = scalar_select 0, %s10, %s8
  %v12 = vstv %s6
  %13 = vst [vmem:[#allocation2] sm:$0x1] %v12
  $region1: #{tpu_custom_call.1} parent=0
    #allocation3 [shape = 'u8[512]{0}', space=vmem, size = 0x400, scoped, tag = 'input window, operand 2, single buffered']
    #allocation4 [shape = 's32[1]{0}', space=sflag, size = 0x4, scoped, tag = 'scoped memory for tpu_custom_call.1']
    %14 = vsyncpa [#allocation4], 0
    // Predicated region
    $region2: #{tpu_custom_call.1} parent=1 // pred_check
      _
    $region3: #{tpu_custom_call.1} parent=1 // pred_check_branch
      %16 = sbr.rel (0) target = $region5
    $region4: #{tpu_custom_call.1} parent=1 // pred_region
      _
    $region5: #{tpu_custom_call.1} parent=1 // pred_fallthru
      _
    // Predicated region
    $region6: #{tpu_custom_call.1} parent=1 // pred_check
      _
    $region7: #{tpu_custom_call.1} parent=1 // pred_check_branch
      %18 = sbr.rel (0) target = $region9
    $region8: #{tpu_custom_call.1} parent=1 // pred_region
      _
    $region9: #{tpu_custom_call.1} parent=1 // pred_fallthru
      _
    // Predicated region
    $region10: #{tpu_custom_call.1} parent=1 // pred_check
      _
    $region11: #{tpu_custom_call.1} parent=1 // pred_check_branch
      %20 = sbr.rel (0) target = $region13
    $region12: #{tpu_custom_call.1} parent=1 // pred_region
      %s22 = ssub.s32 16, 16
      %23 = vsyncadd [#allocation4], %s22
      %s25 = sshll.u32 [#allocation3], 4
      %s26 = int_to_ptr.vmem [resolvable:$true] %s25
      %28 = dma.hbm_to_vmem [thread:$0]  %s2, 16, %s26, [#allocation4]
    $region13: #{tpu_custom_call.1} parent=1 // pred_fallthru
      _
    // Predicated region
    $region14: #{tpu_custom_call.1} parent=1 // pred_check
      _
    $region15: #{tpu_custom_call.1} parent=1 // pred_check_branch
      %30 = sbr.rel (0) target = $region17
    $region16: #{tpu_custom_call.1} parent=1 // pred_region
      _
    $region17: #{tpu_custom_call.1} parent=1 // pred_fallthru
      _
    // Predicated region
    $region18: #{tpu_custom_call.1} parent=1 // pred_check
      _
    $region19: #{tpu_custom_call.1} parent=1 // pred_check_branch
      %32 = sbr.rel (0) target = $region21
    $region20: #{tpu_custom_call.1} parent=1 // pred_region
      _
    $region21: #{tpu_custom_call.1} parent=1 // pred_fallthru
      _
    // Predicated region
    $region22: #{tpu_custom_call.1} parent=1 // pred_check
      _
    $region23: #{tpu_custom_call.1} parent=1 // pred_check_branch
      %34 = sbr.rel (0) target = $region25
    $region24: #{tpu_custom_call.1} parent=1 // pred_region
      _
    $region25: #{tpu_custom_call.1} parent=1 // pred_fallthru
      _
    // Predicated region
    $region26: #{tpu_custom_call.1} parent=1 // pred_check
      _
    $region27: #{tpu_custom_call.1} parent=1 // pred_check_branch
      %36 = sbr.rel (0) target = $region29
    $region28: #{tpu_custom_call.1} parent=1 // pred_region
      _
    $region29: #{tpu_custom_call.1} parent=1 // pred_fallthru
      _
    // Predicated region
    $region30: #{tpu_custom_call.1} parent=1 // pred_check
      _
    $region31: #{tpu_custom_call.1} parent=1 // pred_check_branch
      %38 = sbr.rel (0) target = $region33
    $region32: #{tpu_custom_call.1} parent=1 // pred_region
      %39 = dma.done [#allocation4], 16
    $region33: #{tpu_custom_call.1} parent=1 // pred_fallthru
      _
    %v41 = vld [vmem:[%s0] sm:$0xf]
    %v42 = vld [vmem:[%s1] sm:$0xf]
    %v43 = vld [vmem:[%s1 + $0x4] sm:$0xf]
    %v44 = vld [vmem:[%s1 + $0x8] sm:$0x3]
    %v45 = vld [vmem:[#allocation3] sm:$0x1]
    %v47 = vlaneseq
    %v48 = vshrl.u32 %v47, 7
    %v49 = vsub.s32 0, %v48
    %v50 = vrot.slane %v45, %v49
    %v55 = vunpack.c.l.b16 %v42
    %v56 = vunpack.c.l.b16 %v43
    %v57 = vunpack.c.l.b16 %v44
    %v58 = vpack.c.b16 %v56, %v55
    %v59 = vpack.c.b16 %v57, %v57
    %vm61 = vcmask 162816
    %v63 = vsel %vm61, %v41, 0
    %vm65 = vcmask 1041408
    %v67 = vsel %vm65, %v59, 0
    %69 = vmatprep.subr.bf16.mxu0 0
    %70 = vmatpush1.bf16.msra.mxu0 %v58
    %71 = vmatprep.subr.bf16.mxu0 0
    %72 = vmatpush1.bf16.msra.mxu0 %v67
    %73 = vmatprep.subr.bf16.mxu0 0
    %74 = vmatpush1.bf16.msra.mxu0 0
    %75 = vmatprep.subr.bf16.mxu0 0
    %76 = vmatpush1.bf16.msra.mxu0 0
    %77 = vmatprep.subr.bf16.mxu0 0
    %78 = vmatpush1.bf16.msra.mxu0 0
    %79 = vmatprep.subr.bf16.mxu0 0
    %80 = vmatpush1.bf16.msra.mxu0 0
    %81 = vmatprep.subr.bf16.mxu0 0
    %82 = vmatpush1.bf16.msra.mxu0 0
    %83 = vmatprep.subr.bf16.mxu0 0
    %84 = vmatpush1.bf16.msra.mxu0 0
    %85 = vmatprep.subr.bf16.mxu0 0
    %86 = vmatpush1.bf16.msra.mxu0 0
    %87 = vmatprep.subr.bf16.mxu0 0
    %88 = vmatpush1.bf16.msra.mxu0 0
    %89 = vmatprep.subr.bf16.mxu0 0
    %90 = vmatpush1.bf16.msra.mxu0 0
    %91 = vmatprep.subr.bf16.mxu0 0
    %92 = vmatpush1.bf16.msra.mxu0 0
    %93 = vmatprep.subr.bf16.mxu0 0
    %94 = vmatpush1.bf16.msra.mxu0 0
    %95 = vmatprep.subr.bf16.mxu0 0
    %96 = vmatpush1.bf16.msra.mxu0 0
    %97 = vmatprep.subr.bf16.mxu0 0
    %98 = vmatpush1.bf16.msra.mxu0 0
    %99 = vmatprep.subr.bf16.mxu0 0
    %100 = vmatpush1.bf16.msra.mxu0 0
    %101 = vmatprep.mubr.bf16.mxu0 0
    %102 = vmatmul.mubr.bf16.gmra.mrb[0].mxu0 %v63
    %v103 = vpop.f32.mrb[0].mxu0
    %v104 = vadd.f32 %v50, %v103
    %v105 = vpop.f32.mrb[0].mxu0
    %v106 = vpop.f32.mrb[0].mxu0
    %v107 = vpop.f32.mrb[0].mxu0
    %108 = vdwg.mxu0
    %v109 = vmax.f32 %v104, 0.0
    %v110 = vpack.c.bf16 %v109, %v109
    %v111 = vld [vmem:[%s3] sm:$0xf]
    %v112 = vld [vmem:[%s3 + $0x4] sm:$0xf]
    %v113 = vld [vmem:[%s3 + $0x8] sm:$0xf]
    %v114 = vld [vmem:[%s3 + $0xc] sm:$0xf]
    %v115 = vld [vmem:[%s3 + $0x10] sm:$0xf]
    %v116 = vld [vmem:[%s3 + $0x14] sm:$0xf]
    %v117 = vld [vmem:[%s3 + $0x18] sm:$0xf]
    %v118 = vld [vmem:[%s3 + $0x1c] sm:$0xf]
    %v119 = vld [vmem:[%s3 + $0x20] sm:$0xf]
    %v120 = vld [vmem:[%s3 + $0x24] sm:$0xf]
    %v121 = vld [vmem:[%s3 + $0x28] sm:$0xf]
    %v122 = vld [vmem:[%s3 + $0x2c] sm:$0xf]
    %v123 = vld [vmem:[%s3 + $0x30] sm:$0xf]
    %v124 = vld [vmem:[%s3 + $0x34] sm:$0xf]
    %v125 = vld [vmem:[%s3 + $0x38] sm:$0xf]
    %v126 = vld [vmem:[%s3 + $0x3c] sm:$0xf]
    %v127 = vld [vmem:[%s4] sm:$0x1]
    %v129 = vlaneseq
    %v130 = vshrl.u32 %v129, 7
    %v131 = vsub.s32 0, %v130
    %v132 = vrot.slane %v127, %v131
    %v150 = vunpack.c.l.b16 %v111
    %v151 = vunpack.c.l.b16 %v112
    %v152 = vunpack.c.l.b16 %v113
    %v153 = vunpack.c.l.b16 %v114
    %v154 = vunpack.c.l.b16 %v115
    %v155 = vunpack.c.l.b16 %v116
    %v156 = vunpack.c.l.b16 %v117
    %v157 = vunpack.c.l.b16 %v118
    %v158 = vunpack.c.l.b16 %v119
    %v159 = vunpack.c.l.b16 %v120
    %v160 = vunpack.c.l.b16 %v121
    %v161 = vunpack.c.l.b16 %v122
    %v162 = vunpack.c.l.b16 %v123
    %v163 = vunpack.c.l.b16 %v124
    %v164 = vunpack.c.l.b16 %v125
    %v165 = vunpack.c.l.b16 %v126
    %v166 = vpack.c.b16 %v151, %v150
    %v167 = vpack.c.b16 %v153, %v152
    %v168 = vpack.c.b16 %v155, %v154
    %v169 = vpack.c.b16 %v157, %v156
    %v170 = vpack.c.b16 %v159, %v158
    %v171 = vpack.c.b16 %v161, %v160
    %v172 = vpack.c.b16 %v163, %v162
    %v173 = vpack.c.b16 %v165, %v164
    %182 = vmatprep.subr.bf16.mxu0 0
    %183 = vmatpush1.bf16.msra.mxu0 %v166
    %184 = vmatprep.subr.bf16.mxu0 0
    %185 = vmatpush1.bf16.msra.mxu0 %v167
    %186 = vmatprep.subr.bf16.mxu0 0
    %187 = vmatpush1.bf16.msra.mxu0 %v168
    %188 = vmatprep.subr.bf16.mxu0 0
    %189 = vmatpush1.bf16.msra.mxu0 %v169
    %190 = vmatprep.subr.bf16.mxu0 0
    %191 = vmatpush1.bf16.msra.mxu0 %v170
    %192 = vmatprep.subr.bf16.mxu0 0
    %193 = vmatpush1.bf16.msra.mxu0 %v171
    %194 = vmatprep.subr.bf16.mxu0 0
    %195 = vmatpush1.bf16.msra.mxu0 %v172
    %196 = vmatprep.subr.bf16.mxu0 0
    %197 = vmatpush1.bf16.msra.mxu0 %v173
    %198 = vmatprep.subr.bf16.mxu0 0
    %199 = vmatpush1.bf16.msra.mxu0 0
    %200 = vmatprep.subr.bf16.mxu0 0
    %201 = vmatpush1.bf16.msra.mxu0 0
    %202 = vmatprep.subr.bf16.mxu0 0
    %203 = vmatpush1.bf16.msra.mxu0 0
    %204 = vmatprep.subr.bf16.mxu0 0
    %205 = vmatpush1.bf16.msra.mxu0 0
    %206 = vmatprep.subr.bf16.mxu0 0
    %207 = vmatpush1.bf16.msra.mxu0 0
    %208 = vmatprep.subr.bf16.mxu0 0
    %209 = vmatpush1.bf16.msra.mxu0 0
    %210 = vmatprep.subr.bf16.mxu0 0
    %211 = vmatpush1.bf16.msra.mxu0 0
    %212 = vmatprep.subr.bf16.mxu0 0
    %213 = vmatpush1.bf16.msra.mxu0 0
    %214 = vmatprep.mubr.bf16.mxu0 0
    %215 = vmatmul.mubr.bf16.gmra.mrb[0].mxu0 %v110
    %v216 = vpop.f32.mrb[0].mxu0
    %v217 = vadd.f32 %v132, %v216
    %v218 = vpop.f32.mrb[0].mxu0
    %v219 = vpop.f32.mrb[0].mxu0
    %v220 = vpop.f32.mrb[0].mxu0
    %221 = vdwg.mxu0
    %v222 = vmax.f32 %v217, 0.0
    %v223 = vpack.c.bf16 %v222, %v222
    %v224 = vld [vmem:[%s5] sm:$0xf]
    %v225 = vld [vmem:[%s5 + $0x4] sm:$0xf]
    %v226 = vld [vmem:[%s5 + $0x8] sm:$0xf]
    %v227 = vld [vmem:[%s5 + $0xc] sm:$0xf]
    %v228 = vld [vmem:[%s5 + $0x10] sm:$0xf]
    %v229 = vld [vmem:[%s5 + $0x14] sm:$0xf]
    %v230 = vld [vmem:[%s5 + $0x18] sm:$0xf]
    %v231 = vld [vmem:[%s5 + $0x1c] sm:$0xf]
    %v232 = vld [vmem:[%s5 + $0x20] sm:$0xf]
    %v233 = vld [vmem:[%s5 + $0x24] sm:$0xf]
    %v234 = vld [vmem:[%s5 + $0x28] sm:$0xf]
    %v235 = vld [vmem:[%s5 + $0x2c] sm:$0xf]
    %v236 = vld [vmem:[%s5 + $0x30] sm:$0xf]
    %v237 = vld [vmem:[%s5 + $0x34] sm:$0xf]
    %v238 = vld [vmem:[%s5 + $0x38] sm:$0xf]
    %v239 = vld [vmem:[%s5 + $0x3c] sm:$0xf]
    %v240 = vld [vmem:[#allocation2] sm:$0x1]
    %v242 = vlaneseq
    %v243 = vshrl.u32 %v242, 7
    %v244 = vsub.s32 0, %v243
    %v245 = vrot.slane %v240, %v244
    %v263 = vunpack.c.l.b16 %v224
    %v264 = vunpack.c.l.b16 %v225
    %v265 = vunpack.c.l.b16 %v226
    %v266 = vunpack.c.l.b16 %v227
    %v267 = vunpack.c.l.b16 %v228
    %v268 = vunpack.c.l.b16 %v229
    %v269 = vunpack.c.l.b16 %v230
    %v270 = vunpack.c.l.b16 %v231
    %v271 = vunpack.c.l.b16 %v232
    %v272 = vunpack.c.l.b16 %v233
    %v273 = vunpack.c.l.b16 %v234
    %v274 = vunpack.c.l.b16 %v235
    %v275 = vunpack.c.l.b16 %v236
    %v276 = vunpack.c.l.b16 %v237
    %v277 = vunpack.c.l.b16 %v238
    %v278 = vunpack.c.l.b16 %v239
    %v279 = vpack.c.b16 %v264, %v263
    %v280 = vpack.c.b16 %v266, %v265
    %v281 = vpack.c.b16 %v268, %v267
    %v282 = vpack.c.b16 %v270, %v269
    %v283 = vpack.c.b16 %v272, %v271
    %v284 = vpack.c.b16 %v274, %v273
    %v285 = vpack.c.b16 %v276, %v275
    %v286 = vpack.c.b16 %v278, %v277
    %295 = vmatprep.subr.bf16.mxu0 0
    %296 = vmatpush1.bf16.msra.mxu0 %v279
    %297 = vmatprep.subr.bf16.mxu0 0
    %298 = vmatpush1.bf16.msra.mxu0 %v280
    %299 = vmatprep.subr.bf16.mxu0 0
    %300 = vmatpush1.bf16.msra.mxu0 %v281
    %301 = vmatprep.subr.bf16.mxu0 0
    %302 = vmatpush1.bf16.msra.mxu0 %v282
    %303 = vmatprep.subr.bf16.mxu0 0
    %304 = vmatpush1.bf16.msra.mxu0 %v283
    %305 = vmatprep.subr.bf16.mxu0 0
    %306 = vmatpush1.bf16.msra.mxu0 %v284
    %307 = vmatprep.subr.bf16.mxu0 0
    %308 = vmatpush1.bf16.msra.mxu0 %v285
    %309 = vmatprep.subr.bf16.mxu0 0
    %310 = vmatpush1.bf16.msra.mxu0 %v286
    %311 = vmatprep.subr.bf16.mxu0 0
    %312 = vmatpush1.bf16.msra.mxu0 0
    %313 = vmatprep.subr.bf16.mxu0 0
    %314 = vmatpush1.bf16.msra.mxu0 0
    %315 = vmatprep.subr.bf16.mxu0 0
    %316 = vmatpush1.bf16.msra.mxu0 0
    %317 = vmatprep.subr.bf16.mxu0 0
    %318 = vmatpush1.bf16.msra.mxu0 0
    %319 = vmatprep.subr.bf16.mxu0 0
    %320 = vmatpush1.bf16.msra.mxu0 0
    %321 = vmatprep.subr.bf16.mxu0 0
    %322 = vmatpush1.bf16.msra.mxu0 0
    %323 = vmatprep.subr.bf16.mxu0 0
    %324 = vmatpush1.bf16.msra.mxu0 0
    %325 = vmatprep.subr.bf16.mxu0 0
    %326 = vmatpush1.bf16.msra.mxu0 0
    %327 = vmatprep.mubr.bf16.mxu0 0
    %328 = vmatmul.mubr.bf16.gmra.mrb[0].mxu0 %v223
    %v329 = vpop.f32.mrb[0].mxu0
    %v330 = vadd.f32 %v245, %v329
    %v331 = vpop.f32.mrb[0].mxu0
    %v332 = vpop.f32.mrb[0].mxu0
    %v333 = vpop.f32.mrb[0].mxu0
    %334 = vdwg.mxu0
    %vm335 = vcmask 7168
    %336 = vst.msk [vmem:[%s7] sm:$0xff] %vm335, %v330
    // Predicated region
    $region34: #{tpu_custom_call.1} parent=1 // pred_check
      _
    $region35: #{tpu_custom_call.1} parent=1 // pred_check_branch
      %338 = sbr.rel (0) target = $region37
    $region36: #{tpu_custom_call.1} parent=1 // pred_region
      _
    $region37: #{tpu_custom_call.1} parent=1 // pred_fallthru
      _
    // Predicated region
    $region38: #{tpu_custom_call.1} parent=1 // pred_check
      _
    $region39: #{tpu_custom_call.1} parent=1 // pred_check_branch
      %340 = sbr.rel (0) target = $region41
    $region40: #{tpu_custom_call.1} parent=1 // pred_region
      _
    $region41: #{tpu_custom_call.1} parent=1 // pred_fallthru
      _
    %341 = vsyncpa [#allocation4], 1

</llo_original>
